<compile_context>
chip_gen: v7x
topology: tpu7x:2x2x1
jax: 0.10.0
libtpu: 0.0.40
codegen_flags: <defaults>
</compile_context>

<pallas_src>
import functools

import jax
import jax.numpy as jnp
from jax import lax
from jax.experimental import pallas as pl
from jax.experimental.pallas import tpu as pltpu


def _lgu_kernel(x_ref, wg_ref, wv_ref, wdw_ref, o_ref, *, H, W, BN, use_mxu):
    # x_ref:   (BN, C, H*W)          -- BN images, channels on sublanes, H*W on lanes
    # wg_ref:  (C, C)                -- 1x1 projection weight, gates half
    # wv_ref:  (C, C)                -- 1x1 projection weight, values half
    # wdw_ref: (C, 9)  f32           -- depthwise 3x3 weights, flattened taps (kh*3+kw)
    # o_ref:   (BN, C, H*W)
    C = x_ref.shape[1]
    HW = H * W

    wg = wg_ref[...]
    wv = wv_ref[...]
    wdw = wdw_ref[...]
    taps = [wdw[:, k:k + 1] for k in range(9)]            # (C,1) lane-broadcast taps

    # Lane-index masks, shared by every image in the block (hoisted out of the loop).
    lane = lax.broadcasted_iota(jnp.int32, (C, HW), 1)
    wmod = lane % W
    col_l = wmod >= 1            # source col w-1 in range
    col_r = wmod <= W - 2        # source col w+1 in range
    row_u = lane >= W            # source row h-1 in range
    row_d = lane < HW - W        # source row h+1 in range

    if not use_mxu:
        wg_cols = [wg[:, c:c + 1] for c in range(C)]
        wv_cols = [wv[:, c:c + 1] for c in range(C)]

    for b in range(BN):                                    # static unroll over the block
        x = x_ref[b].astype(jnp.float32)                   # (C, HW), also the residual

        # ---- fused 1x1 projection -> gates / values ------------------------------
        if use_mxu:
            xb = x.astype(jnp.bfloat16)
            gates = jnp.dot(wg, xb, preferred_element_type=jnp.float32)
            values = jnp.dot(wv, xb, preferred_element_type=jnp.float32)
        else:
            # tiny C: exact f32 broadcast-FMAs on the VPU
            xc = x[0:1, :]
            gates = wg_cols[0] * xc
            values = wv_cols[0] * xc
            for c in range(1, C):
                xc = x[c:c + 1, :]
                gates = gates + wg_cols[c] * xc
                values = values + wv_cols[c] * xc

        # ---- depthwise 3x3 (padding=1): separable roll+mask form -----------------
        vl = jnp.where(col_l, pltpu.roll(values, shift=1, axis=1), 0.0)       # src w-1
        vr = jnp.where(col_r, pltpu.roll(values, shift=HW - 1, axis=1), 0.0)  # src w+1
        rows = [vl * taps[3 * ky + 0] + values * taps[3 * ky + 1] + vr * taps[3 * ky + 2]
                for ky in range(3)]
        acc = rows[1]
        acc = acc + jnp.where(row_u, pltpu.roll(rows[0], shift=W, axis=1), 0.0)
        acc = acc + jnp.where(row_d, pltpu.roll(rows[2], shift=HW - W, axis=1), 0.0)

        # ---- SiLU gate, residual (all f32 on the VPU/EUP) -------------------------
        gact = gates * jax.nn.sigmoid(gates)
        o_ref[b] = (acc * gact + x).astype(o_ref.dtype)


def _pick_block_batch(N, C, HW, itemsize, max_block_bytes=4 << 20):
    """Largest divisor of N whose (BN, C, HW) block stays under the per-step budget."""
    per_image = max(C * HW * itemsize, 1)
    cap = max(1, max_block_bytes // per_image)
    bn = 1
    for d in range(1, N + 1):
        if N % d == 0 and d <= cap:
            bn = d
    return bn


def light_gated_unit(x_nchw, w_proj, w_dw, *, block_batch=None):
    """x_nchw: (N, C, H, W); w_proj: (2C, C, 1, 1); w_dw: (C, 1, 3, 3)."""
    N, C, H, W = x_nchw.shape
    HW = H * W
    x2 = x_nchw.reshape(N, C, HW)                  # contiguous NCHW reshape: lane-dense

    use_mxu = C >= 32                              # tiny C -> VPU FMA path (exact f32)
    w_dtype = jnp.bfloat16 if use_mxu else jnp.float32
    wg = w_proj[:C, :, 0, 0].astype(w_dtype)       # (C, C) gates half
    wv = w_proj[C:, :, 0, 0].astype(w_dtype)       # (C, C) values half
    wdw = w_dw.reshape(C, 9).astype(jnp.float32)   # (C, 9) flattened 3x3 taps

    BN = block_batch or _pick_block_batch(N, C, HW, x2.dtype.itemsize)
    grid = (N // BN,)

    out = pl.pallas_call(
        functools.partial(_lgu_kernel, H=H, W=W, BN=BN, use_mxu=use_mxu),
        out_shape=jax.ShapeDtypeStruct((N, C, HW), x_nchw.dtype),
        grid_spec=pltpu.PrefetchScalarGridSpec(
            num_scalar_prefetch=0,
            grid=grid,
            in_specs=[
                pl.BlockSpec((BN, C, HW), lambda n: (n, 0, 0)),
                pl.BlockSpec((C, C), lambda n: (0, 0)),
                pl.BlockSpec((C, C), lambda n: (0, 0)),
                pl.BlockSpec((C, 9), lambda n: (0, 0)),
            ],
            out_specs=pl.BlockSpec((BN, C, HW), lambda n: (n, 0, 0)),
        ),
        compiler_params=pltpu.CompilerParams(
            dimension_semantics=("parallel",),
            vmem_limit_bytes=48 << 20,   # above 16/32 MiB defaults, under v7x physical
        ),
    )(x2, wg, wv, wdw)
    return out.reshape(N, C, H, W)


def ref_forward(x, w_proj, w_dw):
    """Pure-JAX f32 reference matching the PyTorch module semantics (NCHW)."""
    C = x.shape[1]
    proj = lax.conv_general_dilated(
        x, w_proj, (1, 1), 'VALID',
        dimension_numbers=('NCHW', 'OIHW', 'NCHW'),
        precision=lax.Precision.HIGHEST)
    gates, values = proj[:, :C], proj[:, C:]
    values = lax.conv_general_dilated(
        values, w_dw, (1, 1), 'SAME',
        dimension_numbers=('NCHW', 'OIHW', 'NCHW'),
        feature_group_count=C,
        precision=lax.Precision.HIGHEST)
    gates = gates * jax.nn.sigmoid(gates)          # SiLU
    return values * gates + x


if __name__ == "__main__":
    dim, N, H, W = 4, 2, 16, 16
    key = jax.random.PRNGKey(0)
    kx, kp, kd = jax.random.split(key, 3)

    # Deterministic synthetic parameters (bias=False in the module).
    x = jax.random.normal(kx, (N, dim, H, W), jnp.float32)
    w_proj = jax.random.normal(kp, (2 * dim, dim, 1, 1), jnp.float32) * 0.3
    w_dw = jax.random.normal(kd, (dim, 1, 3, 3), jnp.float32) * 0.3

    out = light_gated_unit(x, w_proj, w_dw)
    jax.block_until_ready(out)

    ref = ref_forward(x, w_proj, w_dw)
    assert out.shape == ref.shape == (N, dim, H, W)
    max_err = float(jnp.max(jnp.abs(out - ref)))
    # Tight tolerance: at C=4 the projection runs as exact f32 VPU FMAs (no bf16 MXU).
    assert jnp.allclose(out, ref, rtol=1e-4, atol=1e-4), f"max abs err {max_err}"
    print("KERNEL_OK")
</pallas_src>

<mosaic_0001>
module attributes {stable_mosaic.version = 11 : i64} {
  func.func @_lgu_kernel(%arg0: i32, %arg1: memref<2x4x256xf32, #tpu.memory_space<vmem>>, %arg2: memref<4x4xf32, #tpu.memory_space<vmem>>, %arg3: memref<4x4xf32, #tpu.memory_space<vmem>>, %arg4: memref<4x9xf32, #tpu.memory_space<vmem>>, %arg5: memref<2x4x256xf32, #tpu.memory_space<vmem>>) attributes {dimension_semantics = [#tpu.dimension_semantics<parallel>], iteration_bounds = array<i64: 1>, scalar_prefetch = 0 : i64, scratch_operands = 0 : i64, tpu.core_type = #tpu.core_type<tc>, window_params = [{transform_indices = @transform_0, window_bounds = array<i64: 2, 4, 256>}, {pipeline_mode = #tpu.pipeline_mode<synchronous>, transform_indices = @transform_1, window_bounds = array<i64: 4, 4>}, {pipeline_mode = #tpu.pipeline_mode<synchronous>, transform_indices = @transform_2, window_bounds = array<i64: 4, 4>}, {pipeline_mode = #tpu.pipeline_mode<synchronous>, transform_indices = @transform_3, window_bounds = array<i64: 4, 9>}, {transform_indices = @transform_4, window_bounds = array<i64: 2, 4, 256>}]} {
    %c0 = arith.constant 0 : index
    %c0_0 = arith.constant 0 : index
    %0 = vector.load %arg2[%c0, %c0_0] : memref<4x4xf32, #tpu.memory_space<vmem>>, vector<4x4xf32>
    %c0_1 = arith.constant 0 : index
    %c0_2 = arith.constant 0 : index
    %1 = vector.load %arg3[%c0_1, %c0_2] : memref<4x4xf32, #tpu.memory_space<vmem>>, vector<4x4xf32>
    %c0_3 = arith.constant 0 : index
    %c0_4 = arith.constant 0 : index
    %2 = vector.load %arg4[%c0_3, %c0_4] : memref<4x9xf32, #tpu.memory_space<vmem>>, vector<4x9xf32>
    %3 = vector.extract_strided_slice %2 {offsets = [0, 0], sizes = [4, 1], strides = [1, 1]} : vector<4x9xf32> to vector<4x1xf32>
    %4 = vector.extract_strided_slice %2 {offsets = [0, 1], sizes = [4, 1], strides = [1, 1]} : vector<4x9xf32> to vector<4x1xf32>
    %5 = vector.extract_strided_slice %2 {offsets = [0, 2], sizes = [4, 1], strides = [1, 1]} : vector<4x9xf32> to vector<4x1xf32>
    %6 = vector.extract_strided_slice %2 {offsets = [0, 3], sizes = [4, 1], strides = [1, 1]} : vector<4x9xf32> to vector<4x1xf32>
    %7 = vector.extract_strided_slice %2 {offsets = [0, 4], sizes = [4, 1], strides = [1, 1]} : vector<4x9xf32> to vector<4x1xf32>
    %8 = vector.extract_strided_slice %2 {offsets = [0, 5], sizes = [4, 1], strides = [1, 1]} : vector<4x9xf32> to vector<4x1xf32>
    %9 = vector.extract_strided_slice %2 {offsets = [0, 6], sizes = [4, 1], strides = [1, 1]} : vector<4x9xf32> to vector<4x1xf32>
    %10 = vector.extract_strided_slice %2 {offsets = [0, 7], sizes = [4, 1], strides = [1, 1]} : vector<4x9xf32> to vector<4x1xf32>
    %11 = vector.extract_strided_slice %2 {offsets = [0, 8], sizes = [4, 1], strides = [1, 1]} : vector<4x9xf32> to vector<4x1xf32>
    %12 = tpu.iota {dimensions = array<i32: 1>} : vector<4x256xi32>
    %c16_i32 = arith.constant 16 : i32
    %c0_i32 = arith.constant 0 : i32
    %13 = arith.cmpi eq, %c16_i32, %c0_i32 : i32
    %c1_i32 = arith.constant 1 : i32
    %14 = arith.select %13, %c1_i32, %c16_i32 : i32
    %15 = vector.broadcast %14 : i32 to vector<4x256xi32>
    %16 = arith.remsi %12, %15 : vector<4x256xi32>
    %c0_i32_5 = arith.constant 0 : i32
    %17 = vector.broadcast %c0_i32_5 : i32 to vector<4x256xi32>
    %18 = arith.cmpi ne, %16, %17 : vector<4x256xi32>
    %c0_i32_6 = arith.constant 0 : i32
    %19 = vector.broadcast %c0_i32_6 : i32 to vector<4x256xi32>
    %20 = arith.cmpi slt, %16, %19 : vector<4x256xi32>
    %c0_i32_7 = arith.constant 0 : i32
    %21 = arith.cmpi slt, %14, %c0_i32_7 : i32
    %22 = vector.broadcast %21 : i1 to vector<4x256xi1>
    %23 = vector.broadcast %22 : vector<4x256xi1> to vector<4x256xi1>
    %24 = arith.xori %20, %23 : vector<4x256xi1>
    %25 = arith.andi %24, %18 : vector<4x256xi1>
    %26 = vector.broadcast %14 : i32 to vector<4x256xi32>
    %27 = arith.addi %16, %26 : vector<4x256xi32>
    %28 = arith.select %25, %27, %16 : vector<4x256xi1>, vector<4x256xi32>
    %c1_i32_8 = arith.constant 1 : i32
    %29 = vector.broadcast %c1_i32_8 : i32 to vector<4x256xi32>
    %30 = arith.cmpi sge, %28, %29 : vector<4x256xi32>
    %c14_i32 = arith.constant 14 : i32
    %31 = vector.broadcast %c14_i32 : i32 to vector<4x256xi32>
    %32 = arith.cmpi sle, %28, %31 : vector<4x256xi32>
    %c16_i32_9 = arith.constant 16 : i32
    %33 = vector.broadcast %c16_i32_9 : i32 to vector<4x256xi32>
    %34 = arith.cmpi sge, %12, %33 : vector<4x256xi32>
    %c240_i32 = arith.constant 240 : i32
    %35 = vector.broadcast %c240_i32 : i32 to vector<4x256xi32>
    %36 = arith.cmpi slt, %12, %35 : vector<4x256xi32>
    %37 = vector.extract_strided_slice %0 {offsets = [0, 0], sizes = [4, 1], strides = [1, 1]} : vector<4x4xf32> to vector<4x1xf32>
    %38 = vector.extract_strided_slice %0 {offsets = [0, 1], sizes = [4, 1], strides = [1, 1]} : vector<4x4xf32> to vector<4x1xf32>
    %39 = vector.extract_strided_slice %0 {offsets = [0, 2], sizes = [4, 1], strides = [1, 1]} : vector<4x4xf32> to vector<4x1xf32>
    %40 = vector.extract_strided_slice %0 {offsets = [0, 3], sizes = [4, 1], strides = [1, 1]} : vector<4x4xf32> to vector<4x1xf32>
    %41 = vector.extract_strided_slice %1 {offsets = [0, 0], sizes = [4, 1], strides = [1, 1]} : vector<4x4xf32> to vector<4x1xf32>
    %42 = vector.extract_strided_slice %1 {offsets = [0, 1], sizes = [4, 1], strides = [1, 1]} : vector<4x4xf32> to vector<4x1xf32>
    %43 = vector.extract_strided_slice %1 {offsets = [0, 2], sizes = [4, 1], strides = [1, 1]} : vector<4x4xf32> to vector<4x1xf32>
    %44 = vector.extract_strided_slice %1 {offsets = [0, 3], sizes = [4, 1], strides = [1, 1]} : vector<4x4xf32> to vector<4x1xf32>
    %c0_10 = arith.constant 0 : index
    %c0_11 = arith.constant 0 : index
    %c0_12 = arith.constant 0 : index
    %45 = vector.load %arg1[%c0_10, %c0_11, %c0_12] : memref<2x4x256xf32, #tpu.memory_space<vmem>>, vector<1x4x256xf32>
    %46 = vector.shape_cast %45 : vector<1x4x256xf32> to vector<4x256xf32>
    %47 = vector.extract_strided_slice %46 {offsets = [0, 0], sizes = [1, 256], strides = [1, 1]} : vector<4x256xf32> to vector<1x256xf32>
    %48 = vector.broadcast %37 : vector<4x1xf32> to vector<4x256xf32>
    %49 = vector.broadcast %47 : vector<1x256xf32> to vector<4x256xf32>
    %50 = arith.mulf %48, %49 : vector<4x256xf32>
    %51 = vector.broadcast %41 : vector<4x1xf32> to vector<4x256xf32>
    %52 = vector.broadcast %47 : vector<1x256xf32> to vector<4x256xf32>
    %53 = arith.mulf %51, %52 : vector<4x256xf32>
    %54 = vector.extract_strided_slice %46 {offsets = [1, 0], sizes = [1, 256], strides = [1, 1]} : vector<4x256xf32> to vector<1x256xf32>
    %55 = vector.broadcast %38 : vector<4x1xf32> to vector<4x256xf32>
    %56 = vector.broadcast %54 : vector<1x256xf32> to vector<4x256xf32>
    %57 = arith.mulf %55, %56 : vector<4x256xf32>
    %58 = arith.addf %50, %57 : vector<4x256xf32>
    %59 = vector.broadcast %42 : vector<4x1xf32> to vector<4x256xf32>
    %60 = vector.broadcast %54 : vector<1x256xf32> to vector<4x256xf32>
    %61 = arith.mulf %59, %60 : vector<4x256xf32>
    %62 = arith.addf %53, %61 : vector<4x256xf32>
    %63 = vector.extract_strided_slice %46 {offsets = [2, 0], sizes = [1, 256], strides = [1, 1]} : vector<4x256xf32> to vector<1x256xf32>
    %64 = vector.broadcast %39 : vector<4x1xf32> to vector<4x256xf32>
    %65 = vector.broadcast %63 : vector<1x256xf32> to vector<4x256xf32>
    %66 = arith.mulf %64, %65 : vector<4x256xf32>
    %67 = arith.addf %58, %66 : vector<4x256xf32>
    %68 = vector.broadcast %43 : vector<4x1xf32> to vector<4x256xf32>
    %69 = vector.broadcast %63 : vector<1x256xf32> to vector<4x256xf32>
    %70 = arith.mulf %68, %69 : vector<4x256xf32>
    %71 = arith.addf %62, %70 : vector<4x256xf32>
    %72 = vector.extract_strided_slice %46 {offsets = [3, 0], sizes = [1, 256], strides = [1, 1]} : vector<4x256xf32> to vector<1x256xf32>
    %73 = vector.broadcast %40 : vector<4x1xf32> to vector<4x256xf32>
    %74 = vector.broadcast %72 : vector<1x256xf32> to vector<4x256xf32>
    %75 = arith.mulf %73, %74 : vector<4x256xf32>
    %76 = arith.addf %67, %75 : vector<4x256xf32>
    %77 = vector.broadcast %44 : vector<4x1xf32> to vector<4x256xf32>
    %78 = vector.broadcast %72 : vector<1x256xf32> to vector<4x256xf32>
    %79 = arith.mulf %77, %78 : vector<4x256xf32>
    %80 = arith.addf %71, %79 : vector<4x256xf32>
    %c1_i32_13 = arith.constant 1 : i32
    %81 = tpu.dynamic_rotate %80 by %c1_i32_13 dim 1 : vector<4x256xf32>, i32 -> vector<4x256xf32>
    %cst = arith.constant 0.000000e+00 : f32
    %82 = vector.broadcast %cst : f32 to vector<4x256xf32>
    %83 = arith.select %30, %81, %82 : vector<4x256xi1>, vector<4x256xf32>
    %c255_i32 = arith.constant 255 : i32
    %84 = tpu.dynamic_rotate %80 by %c255_i32 dim 1 : vector<4x256xf32>, i32 -> vector<4x256xf32>
    %cst_14 = arith.constant 0.000000e+00 : f32
    %85 = vector.broadcast %cst_14 : f32 to vector<4x256xf32>
    %86 = arith.select %32, %84, %85 : vector<4x256xi1>, vector<4x256xf32>
    %87 = vector.broadcast %3 : vector<4x1xf32> to vector<4x256xf32>
    %88 = arith.mulf %83, %87 : vector<4x256xf32>
    %89 = vector.broadcast %4 : vector<4x1xf32> to vector<4x256xf32>
    %90 = arith.mulf %80, %89 : vector<4x256xf32>
    %91 = arith.addf %88, %90 : vector<4x256xf32>
    %92 = vector.broadcast %5 : vector<4x1xf32> to vector<4x256xf32>
    %93 = arith.mulf %86, %92 : vector<4x256xf32>
    %94 = arith.addf %91, %93 : vector<4x256xf32>
    %95 = vector.broadcast %6 : vector<4x1xf32> to vector<4x256xf32>
    %96 = arith.mulf %83, %95 : vector<4x256xf32>
    %97 = vector.broadcast %7 : vector<4x1xf32> to vector<4x256xf32>
    %98 = arith.mulf %80, %97 : vector<4x256xf32>
    %99 = arith.addf %96, %98 : vector<4x256xf32>
    %100 = vector.broadcast %8 : vector<4x1xf32> to vector<4x256xf32>
    %101 = arith.mulf %86, %100 : vector<4x256xf32>
    %102 = arith.addf %99, %101 : vector<4x256xf32>
    %103 = vector.broadcast %9 : vector<4x1xf32> to vector<4x256xf32>
    %104 = arith.mulf %83, %103 : vector<4x256xf32>
    %105 = vector.broadcast %10 : vector<4x1xf32> to vector<4x256xf32>
    %106 = arith.mulf %80, %105 : vector<4x256xf32>
    %107 = arith.addf %104, %106 : vector<4x256xf32>
    %108 = vector.broadcast %11 : vector<4x1xf32> to vector<4x256xf32>
    %109 = arith.mulf %86, %108 : vector<4x256xf32>
    %110 = arith.addf %107, %109 : vector<4x256xf32>
    %c16_i32_15 = arith.constant 16 : i32
    %111 = tpu.dynamic_rotate %94 by %c16_i32_15 dim 1 : vector<4x256xf32>, i32 -> vector<4x256xf32>
    %cst_16 = arith.constant 0.000000e+00 : f32
    %112 = vector.broadcast %cst_16 : f32 to vector<4x256xf32>
    %113 = arith.select %34, %111, %112 : vector<4x256xi1>, vector<4x256xf32>
    %114 = arith.addf %102, %113 : vector<4x256xf32>
    %c240_i32_17 = arith.constant 240 : i32
    %115 = tpu.dynamic_rotate %110 by %c240_i32_17 dim 1 : vector<4x256xf32>, i32 -> vector<4x256xf32>
    %cst_18 = arith.constant 0.000000e+00 : f32
    %116 = vector.broadcast %cst_18 : f32 to vector<4x256xf32>
    %117 = arith.select %36, %115, %116 : vector<4x256xi1>, vector<4x256xf32>
    %118 = arith.addf %114, %117 : vector<4x256xf32>
    %119 = arith.negf %76 : vector<4x256xf32>
    %120 = math.exp %119 : vector<4x256xf32>
    %cst_19 = arith.constant 1.000000e+00 : f32
    %121 = vector.broadcast %cst_19 : f32 to vector<4x256xf32>
    %122 = arith.addf %121, %120 : vector<4x256xf32>
    %123 = arith.divf %121, %122 : vector<4x256xf32>
    %124 = arith.mulf %76, %123 : vector<4x256xf32>
    %125 = arith.mulf %118, %124 : vector<4x256xf32>
    %126 = arith.addf %125, %46 : vector<4x256xf32>
    %c0_20 = arith.constant 0 : index
    %c0_21 = arith.constant 0 : index
    %c0_22 = arith.constant 0 : index
    %127 = vector.load %arg5[%c0_20, %c0_21, %c0_22] : memref<2x4x256xf32, #tpu.memory_space<vmem>>, vector<1x4x256xf32>
    %128 = vector.shape_cast %127 : vector<1x4x256xf32> to vector<4x256xf32>
    %129 = vector.shape_cast %126 : vector<4x256xf32> to vector<1x4x256xf32>
    tpu.vector_store %arg5[%c0_20, %c0_21, %c0_22], %129 {strides = array<i32>} : memref<2x4x256xf32, #tpu.memory_space<vmem>>, vector<1x4x256xf32>,
    %c1 = arith.constant 1 : index
    %c0_23 = arith.constant 0 : index
    %c0_24 = arith.constant 0 : index
    %130 = vector.load %arg1[%c1, %c0_23, %c0_24] : memref<2x4x256xf32, #tpu.memory_space<vmem>>, vector<1x4x256xf32>
    %131 = vector.shape_cast %130 : vector<1x4x256xf32> to vector<4x256xf32>
    %132 = vector.extract_strided_slice %131 {offsets = [0, 0], sizes = [1, 256], strides = [1, 1]} : vector<4x256xf32> to vector<1x256xf32>
    %133 = vector.broadcast %37 : vector<4x1xf32> to vector<4x256xf32>
    %134 = vector.broadcast %132 : vector<1x256xf32> to vector<4x256xf32>
    %135 = arith.mulf %133, %134 : vector<4x256xf32>
    %136 = vector.broadcast %41 : vector<4x1xf32> to vector<4x256xf32>
    %137 = vector.broadcast %132 : vector<1x256xf32> to vector<4x256xf32>
    %138 = arith.mulf %136, %137 : vector<4x256xf32>
    %139 = vector.extract_strided_slice %131 {offsets = [1, 0], sizes = [1, 256], strides = [1, 1]} : vector<4x256xf32> to vector<1x256xf32>
    %140 = vector.broadcast %38 : vector<4x1xf32> to vector<4x256xf32>
    %141 = vector.broadcast %139 : vector<1x256xf32> to vector<4x256xf32>
    %142 = arith.mulf %140, %141 : vector<4x256xf32>
    %143 = arith.addf %135, %142 : vector<4x256xf32>
    %144 = vector.broadcast %42 : vector<4x1xf32> to vector<4x256xf32>
    %145 = vector.broadcast %139 : vector<1x256xf32> to vector<4x256xf32>
    %146 = arith.mulf %144, %145 : vector<4x256xf32>
    %147 = arith.addf %138, %146 : vector<4x256xf32>
    %148 = vector.extract_strided_slice %131 {offsets = [2, 0], sizes = [1, 256], strides = [1, 1]} : vector<4x256xf32> to vector<1x256xf32>
    %149 = vector.broadcast %39 : vector<4x1xf32> to vector<4x256xf32>
    %150 = vector.broadcast %148 : vector<1x256xf32> to vector<4x256xf32>
    %151 = arith.mulf %149, %150 : vector<4x256xf32>
    %152 = arith.addf %143, %151 : vector<4x256xf32>
    %153 = vector.broadcast %43 : vector<4x1xf32> to vector<4x256xf32>
    %154 = vector.broadcast %148 : vector<1x256xf32> to vector<4x256xf32>
    %155 = arith.mulf %153, %154 : vector<4x256xf32>
    %156 = arith.addf %147, %155 : vector<4x256xf32>
    %157 = vector.extract_strided_slice %131 {offsets = [3, 0], sizes = [1, 256], strides = [1, 1]} : vector<4x256xf32> to vector<1x256xf32>
    %158 = vector.broadcast %40 : vector<4x1xf32> to vector<4x256xf32>
    %159 = vector.broadcast %157 : vector<1x256xf32> to vector<4x256xf32>
    %160 = arith.mulf %158, %159 : vector<4x256xf32>
    %161 = arith.addf %152, %160 : vector<4x256xf32>
    %162 = vector.broadcast %44 : vector<4x1xf32> to vector<4x256xf32>
    %163 = vector.broadcast %157 : vector<1x256xf32> to vector<4x256xf32>
    %164 = arith.mulf %162, %163 : vector<4x256xf32>
    %165 = arith.addf %156, %164 : vector<4x256xf32>
    %c1_i32_25 = arith.constant 1 : i32
    %166 = tpu.dynamic_rotate %165 by %c1_i32_25 dim 1 : vector<4x256xf32>, i32 -> vector<4x256xf32>
    %cst_26 = arith.constant 0.000000e+00 : f32
    %167 = vector.broadcast %cst_26 : f32 to vector<4x256xf32>
    %168 = arith.select %30, %166, %167 : vector<4x256xi1>, vector<4x256xf32>
    %c255_i32_27 = arith.constant 255 : i32
    %169 = tpu.dynamic_rotate %165 by %c255_i32_27 dim 1 : vector<4x256xf32>, i32 -> vector<4x256xf32>
    %cst_28 = arith.constant 0.000000e+00 : f32
    %170 = vector.broadcast %cst_28 : f32 to vector<4x256xf32>
    %171 = arith.select %32, %169, %170 : vector<4x256xi1>, vector<4x256xf32>
    %172 = vector.broadcast %3 : vector<4x1xf32> to vector<4x256xf32>
    %173 = arith.mulf %168, %172 : vector<4x256xf32>
    %174 = vector.broadcast %4 : vector<4x1xf32> to vector<4x256xf32>
    %175 = arith.mulf %165, %174 : vector<4x256xf32>
    %176 = arith.addf %173, %175 : vector<4x256xf32>
    %177 = vector.broadcast %5 : vector<4x1xf32> to vector<4x256xf32>
    %178 = arith.mulf %171, %177 : vector<4x256xf32>
    %179 = arith.addf %176, %178 : vector<4x256xf32>
    %180 = vector.broadcast %6 : vector<4x1xf32> to vector<4x256xf32>
    %181 = arith.mulf %168, %180 : vector<4x256xf32>
    %182 = vector.broadcast %7 : vector<4x1xf32> to vector<4x256xf32>
    %183 = arith.mulf %165, %182 : vector<4x256xf32>
    %184 = arith.addf %181, %183 : vector<4x256xf32>
    %185 = vector.broadcast %8 : vector<4x1xf32> to vector<4x256xf32>
    %186 = arith.mulf %171, %185 : vector<4x256xf32>
    %187 = arith.addf %184, %186 : vector<4x256xf32>
    %188 = vector.broadcast %9 : vector<4x1xf32> to vector<4x256xf32>
    %189 = arith.mulf %168, %188 : vector<4x256xf32>
    %190 = vector.broadcast %10 : vector<4x1xf32> to vector<4x256xf32>
    %191 = arith.mulf %165, %190 : vector<4x256xf32>
    %192 = arith.addf %189, %191 : vector<4x256xf32>
    %193 = vector.broadcast %11 : vector<4x1xf32> to vector<4x256xf32>
    %194 = arith.mulf %171, %193 : vector<4x256xf32>
    %195 = arith.addf %192, %194 : vector<4x256xf32>
    %c16_i32_29 = arith.constant 16 : i32
    %196 = tpu.dynamic_rotate %179 by %c16_i32_29 dim 1 : vector<4x256xf32>, i32 -> vector<4x256xf32>
    %cst_30 = arith.constant 0.000000e+00 : f32
    %197 = vector.broadcast %cst_30 : f32 to vector<4x256xf32>
    %198 = arith.select %34, %196, %197 : vector<4x256xi1>, vector<4x256xf32>
    %199 = arith.addf %187, %198 : vector<4x256xf32>
    %c240_i32_31 = arith.constant 240 : i32
    %200 = tpu.dynamic_rotate %195 by %c240_i32_31 dim 1 : vector<4x256xf32>, i32 -> vector<4x256xf32>
    %cst_32 = arith.constant 0.000000e+00 : f32
    %201 = vector.broadcast %cst_32 : f32 to vector<4x256xf32>
    %202 = arith.select %36, %200, %201 : vector<4x256xi1>, vector<4x256xf32>
    %203 = arith.addf %199, %202 : vector<4x256xf32>
    %204 = arith.negf %161 : vector<4x256xf32>
    %205 = math.exp %204 : vector<4x256xf32>
    %cst_33 = arith.constant 1.000000e+00 : f32
    %206 = vector.broadcast %cst_33 : f32 to vector<4x256xf32>
    %207 = arith.addf %206, %205 : vector<4x256xf32>
    %208 = arith.divf %206, %207 : vector<4x256xf32>
    %209 = arith.mulf %161, %208 : vector<4x256xf32>
    %210 = arith.mulf %203, %209 : vector<4x256xf32>
    %211 = arith.addf %210, %131 : vector<4x256xf32>
    %c1_34 = arith.constant 1 : index
    %c0_35 = arith.constant 0 : index
    %c0_36 = arith.constant 0 : index
    %212 = vector.load %arg5[%c1_34, %c0_35, %c0_36] : memref<2x4x256xf32, #tpu.memory_space<vmem>>, vector<1x4x256xf32>
    %213 = vector.shape_cast %212 : vector<1x4x256xf32> to vector<4x256xf32>
    %214 = vector.shape_cast %211 : vector<4x256xf32> to vector<1x4x256xf32>
    tpu.vector_store %arg5[%c1_34, %c0_35, %c0_36], %214 {strides = array<i32>} : memref<2x4x256xf32, #tpu.memory_space<vmem>>, vector<1x4x256xf32>,
    return
  }
  func.func @transform_0(%arg0: i32) -> (i32, i32, i32) {
    %c0_i32 = arith.constant 0 : i32
    %c0_i32_0 = arith.constant 0 : i32
    %c0_i32_1 = arith.constant 0 : i32
    return %arg0, %c0_i32, %c0_i32_0 : i32, i32, i32
  }
  func.func @transform_1(%arg0: i32) -> (i32, i32) {
    %c0_i32 = arith.constant 0 : i32
    %c0_i32_0 = arith.constant 0 : i32
    %c0_i32_1 = arith.constant 0 : i32
    return %c0_i32, %c0_i32_0 : i32, i32
  }
  func.func @transform_2(%arg0: i32) -> (i32, i32) {
    %c0_i32 = arith.constant 0 : i32
    %c0_i32_0 = arith.constant 0 : i32
    %c0_i32_1 = arith.constant 0 : i32
    return %c0_i32, %c0_i32_0 : i32, i32
  }
  func.func @transform_3(%arg0: i32) -> (i32, i32) {
    %c0_i32 = arith.constant 0 : i32
    %c0_i32_0 = arith.constant 0 : i32
    %c0_i32_1 = arith.constant 0 : i32
    return %c0_i32, %c0_i32_0 : i32, i32
  }
  func.func @transform_4(%arg0: i32) -> (i32, i32, i32) {
    %c0_i32 = arith.constant 0 : i32
    %c0_i32_0 = arith.constant 0 : i32
    %c0_i32_1 = arith.constant 0 : i32
    return %arg0, %c0_i32, %c0_i32_0 : i32, i32, i32
  }
}

</mosaic_0001>

<llo_original>
// kernel: tpu_custom_call.1
$region0: #{tpu_custom_call.1}
  #allocation0 [shape = 'u32[]', space=smem, size = 0x4, offset = 0x4, fixed_abs, tag = 'smem constant byte address 0x4 - core index']
  #allocation1 [shape = 'u32[144,128]{1,0:T(1,128)}', space=vmem, size = 0x12000, scoped, tag = 'internal scratch']
  %s0 = inlined_call_operand.hbm [shape: f32[2,4,256], index: 0, kind: input, shape index: {}]
  %s1 = inlined_call_operand.hbm [shape: f32[4,4], index: 1, kind: input, shape index: {}]
  %s2 = inlined_call_operand.vmem [shape: f32[4,4], index: 2, kind: input, shape index: {}]
  %s3 = inlined_call_operand.vmem [shape: f32[4,9], index: 3, kind: input, shape index: {}]
  %s4 = inlined_call_operand.hbm [shape: f32[2,4,256], index: 4, kind: output, shape index: {}]
  %s5 = sld [smem:[#allocation0]]
  $region34: #{tpu_custom_call.1} parent=0
    _
  %s7 = ssub.s32 1, %s5
  %s8 = scalar_select 0, %s7, %s5
  $region1: #{tpu_custom_call.1} parent=0
    #allocation2 [shape = 'u8[8192]{0}', space=vmem, size = 0x2000, scoped, tag = 'input window, operand 0, single buffered']
    #allocation3 [shape = 's32[1]{0}', space=sflag, size = 0x4, scoped, tag = 'scoped memory for tpu_custom_call.1']
    #allocation4 [shape = 's32[1]{0}', space=sflag, size = 0x4, scoped, tag = 'scoped memory for tpu_custom_call.1']
    #allocation5 [shape = 'u8[2048]{0}', space=vmem, size = 0x800, scoped, tag = 'input window, operand 1, single buffered']
    #allocation6 [shape = 's32[1]{0}', space=sflag, size = 0x4, scoped, tag = 'scoped memory for tpu_custom_call.1']
    #allocation7 [shape = 'u8[8192]{0}', space=vmem, size = 0x2000, scoped, tag = 'output window, operand 0, single buffered']
    %9 = vsyncpa [#allocation3], 0
    %10 = vsyncpa [#allocation6], 0
    %11 = vsyncpa [#allocation4], 0
    // Predicated region
    $region2: #{tpu_custom_call.1} parent=1 // pred_check
      _
    $region3: #{tpu_custom_call.1} parent=1 // pred_check_branch
      %13 = sbr.rel (0) target = $region5
    $region4: #{tpu_custom_call.1} parent=1 // pred_region
      %s15 = ssub.s32 256, 256
      %16 = vsyncadd [#allocation3], %s15
      %s17 = sshll.u32 [#allocation2], 4
      %s18 = int_to_ptr.vmem [resolvable:$true] %s17
      %23 = dma.hbm_to_vmem [thread:$0]  %s0, 256, %s18, [#allocation3], 128, 128, 8
    $region5: #{tpu_custom_call.1} parent=1 // pred_fallthru
      _
    // Predicated region
    $region6: #{tpu_custom_call.1} parent=1 // pred_check
      _
    $region7: #{tpu_custom_call.1} parent=1 // pred_check_branch
      %25 = sbr.rel (0) target = $region9
    $region8: #{tpu_custom_call.1} parent=1 // pred_region
      %s27 = ssub.s32 64, 64
      %28 = vsyncadd [#allocation6], %s27
      %s30 = sshll.u32 [#allocation5], 4
      %s31 = int_to_ptr.vmem [resolvable:$true] %s30
      %33 = dma.hbm_to_vmem [thread:$0]  %s1, 64, %s31, [#allocation6]
    $region9: #{tpu_custom_call.1} parent=1 // pred_fallthru
      _
    // Predicated region
    $region10: #{tpu_custom_call.1} parent=1 // pred_check
      _
    $region11: #{tpu_custom_call.1} parent=1 // pred_check_branch
      %35 = sbr.rel (0) target = $region13
    $region12: #{tpu_custom_call.1} parent=1 // pred_region
      _
    $region13: #{tpu_custom_call.1} parent=1 // pred_fallthru
      _
    // Predicated region
    $region14: #{tpu_custom_call.1} parent=1 // pred_check
      _
    $region15: #{tpu_custom_call.1} parent=1 // pred_check_branch
      %37 = sbr.rel (0) target = $region17
    $region16: #{tpu_custom_call.1} parent=1 // pred_region
      _
    $region17: #{tpu_custom_call.1} parent=1 // pred_fallthru
      _
    // Predicated region
    $region18: #{tpu_custom_call.1} parent=1 // pred_check
      _
    $region19: #{tpu_custom_call.1} parent=1 // pred_check_branch
      %39 = sbr.rel (0) target = $region21
    $region20: #{tpu_custom_call.1} parent=1 // pred_region
      %40 = dma.done [#allocation3], 256
    $region21: #{tpu_custom_call.1} parent=1 // pred_fallthru
      _
    // Predicated region
    $region22: #{tpu_custom_call.1} parent=1 // pred_check
      _
    $region23: #{tpu_custom_call.1} parent=1 // pred_check_branch
      %42 = sbr.rel (0) target = $region25
    $region24: #{tpu_custom_call.1} parent=1 // pred_region
      %43 = dma.done [#allocation6], 64
    $region25: #{tpu_custom_call.1} parent=1 // pred_fallthru
      _
    %v44 = vld [vmem:[#allocation5] sm:$0xf]
    %v45 = vld [vmem:[%s2] sm:$0xf]
    %v46 = vld [vmem:[%s3] sm:$0xf]
    %v47 = vlaneseq
    %v48 = vand.u32 %v47, 127
    %v49 = vadd.s32 %v48, 128
    %vm50 = vcmp.lt.s32.totalorder %v48, 0
    %v51 = vsub.s32 0, %v48
    %v52 = vsel %vm50, %v51, %v48
    %v53 = vshrl.u32 %v52, 4
    %v54 = vand.u32 %v52, 15
    %v55 = vsub.s32 0, %v54
    %v56 = vsel %vm50, %v55, %v54
    %vm57 = vcmp.lt.s32.totalorder %v49, 0
    %v58 = vsub.s32 0, %v49
    %v59 = vsel %vm57, %v58, %v49
    %v60 = vshrl.u32 %v59, 4
    %v61 = vand.u32 %v59, 15
    %v62 = vsub.s32 0, %v61
    %v63 = vsel %vm57, %v62, %v61
    %vm64 = vcmp.ne.s32.totalorder %v56, 0
    %vm65 = vcmp.ne.s32.totalorder %v63, 0
    %vm66 = vcmp.lt.s32.totalorder %v56, 0
    %vm67 = vcmp.lt.s32.totalorder %v63, 0
    %vm68 = vmand %vm66, %vm64
    %vm69 = vmand %vm67, %vm65
    %v70 = vadd.s32 %v56, 16
    %v71 = vadd.s32 %v63, 16
    %v72 = vsel %vm68, %v70, %v56
    %v73 = vsel %vm69, %v71, %v63
    %vm74 = vcmp.ge.s32.totalorder %v72, 1
    %vm75 = vcmp.ge.s32.totalorder %v73, 1
    %vm76 = vcmp.le.s32.totalorder %v72, 14
    %vm77 = vcmp.le.s32.totalorder %v73, 14
    %vm78 = vcmp.ge.s32.totalorder %v48, 16
    %vm79 = vcmp.ge.s32.totalorder %v49, 16
    %vm80 = vcmp.lt.s32.totalorder %v48, 240
    %vm81 = vcmp.lt.s32.totalorder %v49, 240
    %v82 = vld [vmem:[#allocation2] sm:$0xff]
    %84 = vset.pattern.permute.xlu0 0
    %85 = vperm.xlu0 %84, %v44
    %v86 = vpop.permute.xlu0 %85
    %v89 = vlaneseq
    %v90 = vshrl.u32 %v89, 7
    %v91 = vsub.s32 0, %v90
    %v92 = vrot.slane %v82, %v91
    %v93 = vlaneseq
    %v94 = vshrl.u32 %v93, 7
    %v95 = vsub.s32 4, %v94
    %v96 = vrot.slane %v82, %v95
    %v99 = vlaneseq
    %v100 = vshrl.u32 %v99, 7
    %v101 = vsub.s32 0, %v100
    %v102 = vrot.slane %v92, %v101
    %v103 = vlaneseq
    %v104 = vshrl.u32 %v103, 7
    %v105 = vsub.s32 0, %v104
    %v106 = vrot.slane %v96, %v105
    %v107 = vmul.f32 %v86, %v102
    %v108 = vmul.f32 %v86, %v106
    %110 = vset.pattern.permute.xlu0 0
    %111 = vperm.xlu0 %110, %v45
    %v112 = vpop.permute.xlu0 %111
    %v114 = vmul.f32 %v112, %v102
    %v115 = vmul.f32 %v112, %v106
    %116 = vset.pattern.permute.xlu0 1
    %117 = vperm.xlu0 %116, %v44
    %v118 = vpop.permute.xlu0 %117
    %v120 = vlaneseq
    %v121 = vshrl.u32 %v120, 7
    %v122 = vsub.s32 1, %v121
    %v123 = vrot.slane %v82, %v122
    %v124 = vlaneseq
    %v125 = vshrl.u32 %v124, 7
    %v126 = vsub.s32 5, %v125
    %v127 = vrot.slane %v82, %v126
    %v130 = vlaneseq
    %v131 = vshrl.u32 %v130, 7
    %v132 = vsub.s32 1, %v131
    %v133 = vrot.slane %v123, %v132
    %v134 = vlaneseq
    %v135 = vshrl.u32 %v134, 7
    %v136 = vsub.s32 1, %v135
    %v137 = vrot.slane %v127, %v136
    %v138 = vmul.f32 %v118, %v133
    %v139 = vmul.f32 %v118, %v137
    %v140 = vadd.f32 %v107, %v138
    %v141 = vadd.f32 %v108, %v139
    %142 = vset.pattern.permute.xlu0 1
    %143 = vperm.xlu0 %142, %v45
    %v144 = vpop.permute.xlu0 %143
    %v146 = vmul.f32 %v144, %v133
    %v147 = vmul.f32 %v144, %v137
    %v148 = vadd.f32 %v114, %v146
    %v149 = vadd.f32 %v115, %v147
    %150 = vset.pattern.permute.xlu0 2
    %151 = vperm.xlu0 %150, %v44
    %v152 = vpop.permute.xlu0 %151
    %v154 = vlaneseq
    %v155 = vshrl.u32 %v154, 7
    %v156 = vsub.s32 2, %v155
    %v157 = vrot.slane %v82, %v156
    %v158 = vlaneseq
    %v159 = vshrl.u32 %v158, 7
    %v160 = vsub.s32 6, %v159
    %v161 = vrot.slane %v82, %v160
    %v164 = vlaneseq
    %v165 = vshrl.u32 %v164, 7
    %v166 = vsub.s32 2, %v165
    %v167 = vrot.slane %v157, %v166
    %v168 = vlaneseq
    %v169 = vshrl.u32 %v168, 7
    %v170 = vsub.s32 2, %v169
    %v171 = vrot.slane %v161, %v170
    %v172 = vmul.f32 %v152, %v167
    %v173 = vmul.f32 %v152, %v171
    %v174 = vadd.f32 %v140, %v172
    %v175 = vadd.f32 %v141, %v173
    %176 = vset.pattern.permute.xlu0 2
    %177 = vperm.xlu0 %176, %v45
    %v178 = vpop.permute.xlu0 %177
    %v180 = vmul.f32 %v178, %v167
    %v181 = vmul.f32 %v178, %v171
    %v182 = vadd.f32 %v148, %v180
    %v183 = vadd.f32 %v149, %v181
    %184 = vset.pattern.permute.xlu0 3
    %185 = vperm.xlu0 %184, %v44
    %v186 = vpop.permute.xlu0 %185
    %v188 = vlaneseq
    %v189 = vshrl.u32 %v188, 7
    %v190 = vsub.s32 3, %v189
    %v191 = vrot.slane %v82, %v190
    %v192 = vlaneseq
    %v193 = vshrl.u32 %v192, 7
    %v194 = vsub.s32 7, %v193
    %v195 = vrot.slane %v82, %v194
    %v198 = vlaneseq
    %v199 = vshrl.u32 %v198, 7
    %v200 = vsub.s32 3, %v199
    %v201 = vrot.slane %v191, %v200
    %v202 = vlaneseq
    %v203 = vshrl.u32 %v202, 7
    %v204 = vsub.s32 3, %v203
    %v205 = vrot.slane %v195, %v204
    %v206 = vmul.f32 %v186, %v201
    %v207 = vmul.f32 %v186, %v205
    %v208 = vadd.f32 %v174, %v206
    %v209 = vadd.f32 %v175, %v207
    %210 = vset.pattern.permute.xlu0 3
    %211 = vperm.xlu0 %210, %v45
    %v212 = vpop.permute.xlu0 %211
    %v214 = vmul.f32 %v212, %v201
    %v215 = vmul.f32 %v212, %v205
    %v216 = vadd.f32 %v182, %v214
    %v217 = vadd.f32 %v183, %v215
    %218 = vrot.lane.b32.xlu0 %v216, 1
    %v219 = vpop.permute.xlu0 %218
    %220 = vrot.lane.b32.xlu0 %v217, 1
    %v221 = vpop.permute.xlu0 %220
    %vm222 = vcmp.lt.s32.totalorder %v48, 1
    %v223 = vsel %vm222, %v219, %v221
    %v224 = vsel %vm222, %v221, %v219
    %v225 = vsel %vm74, %v224, 0.0
    %v226 = vsel %vm75, %v223, 0.0
    %227 = vrot.lane.b32.xlu0 %v216, 127
    %v228 = vpop.permute.xlu0 %227
    %229 = vrot.lane.b32.xlu0 %v217, 127
    %v230 = vpop.permute.xlu0 %229
    %vm231 = vcmp.lt.s32.totalorder %v48, 127
    %v232 = vsel %vm231, %v228, %v230
    %v233 = vsel %vm231, %v230, %v228
    %v234 = vsel %vm76, %v232, 0.0
    %v235 = vsel %vm77, %v233, 0.0
    %237 = vset.pattern.permute.xlu0 0
    %238 = vperm.xlu0 %237, %v46
    %v239 = vpop.permute.xlu0 %238
    %v241 = vmul.f32 %v225, %v239
    %v242 = vmul.f32 %v226, %v239
    %243 = vset.pattern.permute.xlu0 1
    %244 = vperm.xlu0 %243, %v46
    %v245 = vpop.permute.xlu0 %244
    %v247 = vmul.f32 %v216, %v245
    %v248 = vmul.f32 %v217, %v245
    %v249 = vadd.f32 %v241, %v247
    %v250 = vadd.f32 %v242, %v248
    %251 = vset.pattern.permute.xlu0 2
    %252 = vperm.xlu0 %251, %v46
    %v253 = vpop.permute.xlu0 %252
    %v255 = vmul.f32 %v234, %v253
    %v256 = vmul.f32 %v235, %v253
    %v257 = vadd.f32 %v249, %v255
    %v258 = vadd.f32 %v250, %v256
    %259 = vset.pattern.permute.xlu0 3
    %260 = vperm.xlu0 %259, %v46
    %v261 = vpop.permute.xlu0 %260
    %v263 = vmul.f32 %v225, %v261
    %v264 = vmul.f32 %v226, %v261
    %265 = vset.pattern.permute.xlu0 4
    %266 = vperm.xlu0 %265, %v46
    %v267 = vpop.permute.xlu0 %266
    %v269 = vmul.f32 %v216, %v267
    %v270 = vmul.f32 %v217, %v267
    %v271 = vadd.f32 %v263, %v269
    %v272 = vadd.f32 %v264, %v270
    %273 = vset.pattern.permute.xlu0 5
    %274 = vperm.xlu0 %273, %v46
    %v275 = vpop.permute.xlu0 %274
    %v277 = vmul.f32 %v234, %v275
    %v278 = vmul.f32 %v235, %v275
    %v279 = vadd.f32 %v271, %v277
    %v280 = vadd.f32 %v272, %v278
    %281 = vset.pattern.permute.xlu0 6
    %282 = vperm.xlu0 %281, %v46
    %v283 = vpop.permute.xlu0 %282
    %v285 = vmul.f32 %v225, %v283
    %v286 = vmul.f32 %v226, %v283
    %287 = vset.pattern.permute.xlu0 7
    %288 = vperm.xlu0 %287, %v46
    %v289 = vpop.permute.xlu0 %288
    %v291 = vmul.f32 %v216, %v289
    %v292 = vmul.f32 %v217, %v289
    %v293 = vadd.f32 %v285, %v291
    %v294 = vadd.f32 %v286, %v292
    %295 = vset.pattern.permute.xlu0 8
    %296 = vperm.xlu0 %295, %v46
    %v297 = vpop.permute.xlu0 %296
    %v299 = vmul.f32 %v234, %v297
    %v300 = vmul.f32 %v235, %v297
    %v301 = vadd.f32 %v293, %v299
    %v302 = vadd.f32 %v294, %v300
    %303 = vrot.lane.b32.xlu0 %v257, 16
    %v304 = vpop.permute.xlu0 %303
    %305 = vrot.lane.b32.xlu0 %v258, 16
    %v306 = vpop.permute.xlu0 %305
    %vm307 = vcmp.lt.s32.totalorder %v48, 16
    %v308 = vsel %vm307, %v304, %v306
    %v309 = vsel %vm307, %v306, %v304
    %v310 = vsel %vm78, %v309, 0.0
    %v311 = vsel %vm79, %v308, 0.0
    %v312 = vadd.f32 %v279, %v310
    %v313 = vadd.f32 %v280, %v311
    %314 = vrot.lane.b32.xlu0 %v301, 112
    %v315 = vpop.permute.xlu0 %314
    %316 = vrot.lane.b32.xlu0 %v302, 112
    %v317 = vpop.permute.xlu0 %316
    %vm318 = vcmp.lt.s32.totalorder %v48, 112
    %v319 = vsel %vm318, %v315, %v317
    %v320 = vsel %vm318, %v317, %v315
    %v321 = vsel %vm80, %v319, 0.0
    %v322 = vsel %vm81, %v320, 0.0
    %v323 = vadd.f32 %v312, %v321
    %v324 = vadd.f32 %v313, %v322
    %v325 = vxor.u32 %v208, 2147483648
    %v326 = vxor.u32 %v209, 2147483648
    %v327 = vmul.f32 %v325, 1.442695
    %v328 = vpow.pop %v327
    %v329 = vmul.f32 %v326, 1.442695
    %v330 = vpow.pop %v329
    %v331 = vadd.f32 %v328, 1.0
    %v332 = vadd.f32 %v330, 1.0
    %v333 = vrcp.pop %v331
    %v334 = vmul.f32 1.0, %v333
    %v335 = vrcp.pop %v332
    %v336 = vmul.f32 1.0, %v335
    %v337 = vmul.f32 %v208, %v334
    %v338 = vmul.f32 %v209, %v336
    %v339 = vmul.f32 %v323, %v337
    %v340 = vmul.f32 %v324, %v338
    %v341 = vcombine.high %v82, %v82
    %v343 = vadd.f32 %v339, %v82
    %v344 = vadd.f32 %v340, %v341
    %v347 = vcombine.low %v343, %v344
    %349 = vst [vmem:[#allocation7] sm:$0xff] %v347
    %s350 = scalar_lea.vmem [#allocation2], 8
    %v351 = vld [vmem:[%s350] sm:$0xff]
    %v353 = vlaneseq
    %v354 = vshrl.u32 %v353, 7
    %v355 = vsub.s32 0, %v354
    %v356 = vrot.slane %v351, %v355
    %v357 = vlaneseq
    %v358 = vshrl.u32 %v357, 7
    %v359 = vsub.s32 4, %v358
    %v360 = vrot.slane %v351, %v359
    %v363 = vlaneseq
    %v364 = vshrl.u32 %v363, 7
    %v365 = vsub.s32 0, %v364
    %v366 = vrot.slane %v356, %v365
    %v367 = vlaneseq
    %v368 = vshrl.u32 %v367, 7
    %v369 = vsub.s32 0, %v368
    %v370 = vrot.slane %v360, %v369
    %v371 = vmul.f32 %v86, %v366
    %v372 = vmul.f32 %v86, %v370
    %v373 = vmul.f32 %v112, %v366
    %v374 = vmul.f32 %v112, %v370
    %v375 = vlaneseq
    %v376 = vshrl.u32 %v375, 7
    %v377 = vsub.s32 1, %v376
    %v378 = vrot.slane %v351, %v377
    %v379 = vlaneseq
    %v380 = vshrl.u32 %v379, 7
    %v381 = vsub.s32 5, %v380
    %v382 = vrot.slane %v351, %v381
    %v385 = vlaneseq
    %v386 = vshrl.u32 %v385, 7
    %v387 = vsub.s32 1, %v386
    %v388 = vrot.slane %v378, %v387
    %v389 = vlaneseq
    %v390 = vshrl.u32 %v389, 7
    %v391 = vsub.s32 1, %v390
    %v392 = vrot.slane %v382, %v391
    %v393 = vmul.f32 %v118, %v388
    %v394 = vmul.f32 %v118, %v392
    %v395 = vadd.f32 %v371, %v393
    %v396 = vadd.f32 %v372, %v394
    %v397 = vmul.f32 %v144, %v388
    %v398 = vmul.f32 %v144, %v392
    %v399 = vadd.f32 %v373, %v397
    %v400 = vadd.f32 %v374, %v398
    %v401 = vlaneseq
    %v402 = vshrl.u32 %v401, 7
    %v403 = vsub.s32 2, %v402
    %v404 = vrot.slane %v351, %v403
    %v405 = vlaneseq
    %v406 = vshrl.u32 %v405, 7
    %v407 = vsub.s32 6, %v406
    %v408 = vrot.slane %v351, %v407
    %v411 = vlaneseq
    %v412 = vshrl.u32 %v411, 7
    %v413 = vsub.s32 2, %v412
    %v414 = vrot.slane %v404, %v413
    %v415 = vlaneseq
    %v416 = vshrl.u32 %v415, 7
    %v417 = vsub.s32 2, %v416
    %v418 = vrot.slane %v408, %v417
    %v419 = vmul.f32 %v152, %v414
    %v420 = vmul.f32 %v152, %v418
    %v421 = vadd.f32 %v395, %v419
    %v422 = vadd.f32 %v396, %v420
    %v423 = vmul.f32 %v178, %v414
    %v424 = vmul.f32 %v178, %v418
    %v425 = vadd.f32 %v399, %v423
    %v426 = vadd.f32 %v400, %v424
    %v427 = vlaneseq
    %v428 = vshrl.u32 %v427, 7
    %v429 = vsub.s32 3, %v428
    %v430 = vrot.slane %v351, %v429
    %v431 = vlaneseq
    %v432 = vshrl.u32 %v431, 7
    %v433 = vsub.s32 7, %v432
    %v434 = vrot.slane %v351, %v433
    %v437 = vlaneseq
    %v438 = vshrl.u32 %v437, 7
    %v439 = vsub.s32 3, %v438
    %v440 = vrot.slane %v430, %v439
    %v441 = vlaneseq
    %v442 = vshrl.u32 %v441, 7
    %v443 = vsub.s32 3, %v442
    %v444 = vrot.slane %v434, %v443
    %v445 = vmul.f32 %v186, %v440
    %v446 = vmul.f32 %v186, %v444
    %v447 = vadd.f32 %v421, %v445
    %v448 = vadd.f32 %v422, %v446
    %v449 = vmul.f32 %v212, %v440
    %v450 = vmul.f32 %v212, %v444
    %v451 = vadd.f32 %v425, %v449
    %v452 = vadd.f32 %v426, %v450
    %453 = vrot.lane.b32.xlu0 %v451, 1
    %v454 = vpop.permute.xlu0 %453
    %455 = vrot.lane.b32.xlu0 %v452, 1
    %v456 = vpop.permute.xlu0 %455
    %v457 = vsel %vm222, %v454, %v456
    %v458 = vsel %vm222, %v456, %v454
    %v459 = vsel %vm74, %v458, 0.0
    %v460 = vsel %vm75, %v457, 0.0
    %461 = vrot.lane.b32.xlu0 %v451, 127
    %v462 = vpop.permute.xlu0 %461
    %463 = vrot.lane.b32.xlu0 %v452, 127
    %v464 = vpop.permute.xlu0 %463
    %v465 = vsel %vm231, %v462, %v464
    %v466 = vsel %vm231, %v464, %v462
    %v467 = vsel %vm76, %v465, 0.0
    %v468 = vsel %vm77, %v466, 0.0
    %v469 = vmul.f32 %v459, %v239
    %v470 = vmul.f32 %v460, %v239
    %v471 = vmul.f32 %v451, %v245
    %v472 = vmul.f32 %v452, %v245
    %v473 = vadd.f32 %v469, %v471
    %v474 = vadd.f32 %v470, %v472
    %v475 = vmul.f32 %v467, %v253
    %v476 = vmul.f32 %v468, %v253
    %v477 = vadd.f32 %v473, %v475
    %v478 = vadd.f32 %v474, %v476
    %v479 = vmul.f32 %v459, %v261
    %v480 = vmul.f32 %v460, %v261
    %v481 = vmul.f32 %v451, %v267
    %v482 = vmul.f32 %v452, %v267
    %v483 = vadd.f32 %v479, %v481
    %v484 = vadd.f32 %v480, %v482
    %v485 = vmul.f32 %v467, %v275
    %v486 = vmul.f32 %v468, %v275
    %v487 = vadd.f32 %v483, %v485
    %v488 = vadd.f32 %v484, %v486
    %v489 = vmul.f32 %v459, %v283
    %v490 = vmul.f32 %v460, %v283
    %v491 = vmul.f32 %v451, %v289
    %v492 = vmul.f32 %v452, %v289
    %v493 = vadd.f32 %v489, %v491
    %v494 = vadd.f32 %v490, %v492
    %v495 = vmul.f32 %v467, %v297
    %v496 = vmul.f32 %v468, %v297
    %v497 = vadd.f32 %v493, %v495
    %v498 = vadd.f32 %v494, %v496
    %499 = vrot.lane.b32.xlu0 %v477, 16
    %v500 = vpop.permute.xlu0 %499
    %501 = vrot.lane.b32.xlu0 %v478, 16
    %v502 = vpop.permute.xlu0 %501
    %v503 = vsel %vm307, %v500, %v502
    %v504 = vsel %vm307, %v502, %v500
    %v505 = vsel %vm78, %v504, 0.0
    %v506 = vsel %vm79, %v503, 0.0
    %v507 = vadd.f32 %v487, %v505
    %v508 = vadd.f32 %v488, %v506
    %509 = vrot.lane.b32.xlu0 %v497, 112
    %v510 = vpop.permute.xlu0 %509
    %511 = vrot.lane.b32.xlu0 %v498, 112
    %v512 = vpop.permute.xlu0 %511
    %v513 = vsel %vm318, %v510, %v512
    %v514 = vsel %vm318, %v512, %v510
    %v515 = vsel %vm80, %v513, 0.0
    %v516 = vsel %vm81, %v514, 0.0
    %v517 = vadd.f32 %v507, %v515
    %v518 = vadd.f32 %v508, %v516
    %v519 = vxor.u32 %v447, 2147483648
    %v520 = vxor.u32 %v448, 2147483648
    %v521 = vmul.f32 %v519, 1.442695
    %v522 = vpow.pop %v521
    %v523 = vmul.f32 %v520, 1.442695
    %v524 = vpow.pop %v523
    %v525 = vadd.f32 %v522, 1.0
    %v526 = vadd.f32 %v524, 1.0
    %v527 = vrcp.pop %v525
    %v528 = vmul.f32 1.0, %v527
    %v529 = vrcp.pop %v526
    %v530 = vmul.f32 1.0, %v529
    %v531 = vmul.f32 %v447, %v528
    %v532 = vmul.f32 %v448, %v530
    %v533 = vmul.f32 %v517, %v531
    %v534 = vmul.f32 %v518, %v532
    %v535 = vcombine.high %v351, %v351
    %v537 = vadd.f32 %v533, %v351
    %v538 = vadd.f32 %v534, %v535
    %v541 = vcombine.low %v537, %v538
    %s543 = scalar_lea.vmem [#allocation7], 8
    %544 = vst [vmem:[%s543] sm:$0xff] %v541
    // Predicated region
    $region26: #{tpu_custom_call.1} parent=1 // pred_check
      _
    $region27: #{tpu_custom_call.1} parent=1 // pred_check_branch
      %546 = sbr.rel (0) target = $region29
    $region28: #{tpu_custom_call.1} parent=1 // pred_region
      %s548 = ssub.s32 256, 256
      %549 = vsyncadd [#allocation4], %s548
      %s550 = sshll.u32 [#allocation7], 4
      %s551 = int_to_ptr.vmem [resolvable:$true] %s550
      %556 = dma.vmem_to_hbm [thread:$0]  %s551, 256, %s4, [#allocation4], 128, 128, 8
    $region29: #{tpu_custom_call.1} parent=1 // pred_fallthru
      _
    // Predicated region
    $region30: #{tpu_custom_call.1} parent=1 // pred_check
      _
    $region31: #{tpu_custom_call.1} parent=1 // pred_check_branch
      %558 = sbr.rel (0) target = $region33
    $region32: #{tpu_custom_call.1} parent=1 // pred_region
      %559 = dma.done [#allocation4], 256
    $region33: #{tpu_custom_call.1} parent=1 // pred_fallthru
      _
    %560 = vsyncpa [#allocation3], 1
    %561 = vsyncpa [#allocation6], 1
    %562 = vsyncpa [#allocation4], 1

</llo_original>
